<compile_context>
chip_gen: v6e
topology: v6e:2x2x1
jax: 0.10.0
libtpu: 0.0.40
codegen_flags: <defaults>
</compile_context>

<pallas_src>
import jax
import jax.numpy as jnp
from jax.experimental import pallas as pl
from jax.experimental.pallas import tpu as pltpu


def _mlp_kernel(w1_ref, b1_ref, w2_ref, b2_ref, x_ref, out_ref):
    """One batch tile of fc2(relu(fc1(x))).

    w1_ref: (H, IN) SMEM   b1_ref: (H,) SMEM
    w2_ref: (H,)    SMEM   b2_ref: (1,) SMEM
    x_ref : (IN, S, 128) VMEM   -- batch dense on (sublane, lane)
    out   : (S, 128)     VMEM
    """
    IN = x_ref.shape[0]
    H = b1_ref.shape[0]

    # Load each input-feature slab once; reused across all H hidden units.
    xs = [x_ref[i] for i in range(IN)]           # IN x (S, 128) f32

    acc = None
    for h in range(H):                           # unrolled (H = 10)
        # fc1 row h: scalar-weight multiply-adds on the VPU.
        z = xs[0] * w1_ref[h, 0]
        for i in range(1, IN):
            z = z + xs[i] * w1_ref[h, i]
        z = jnp.maximum(z + b1_ref[h], 0.0)      # ReLU
        zc = z * w2_ref[h]                       # fc2 contribution of unit h
        acc = zc if acc is None else acc + zc
    out_ref[...] = acc + b2_ref[0]


def sacred_pause_forward(x, w1, b1, w2, b2, *, tb=128 * 1024):
    """x: (B, input_size) f32 -> score: (B, 1) f32.

    Weights in PyTorch layout: w1 (H, IN), b1 (H,), w2 (1, H), b2 (1,).
    `tb` = batch samples per grid step (rounded to a multiple of 1024).
    """
    B, IN = x.shape
    H = w1.shape[0]
    LANES, SUBS = 128, 8
    chunk = LANES * SUBS                 # 1024: minimal fully dense batch granule

    # Tile selection: multiple of 1024, no bigger than the padded batch,
    # and >= 2 grid steps when possible (v7x megacore sharding).
    tb = max(chunk, (int(tb) // chunk) * chunk)
    b_min = pl.cdiv(B, chunk) * chunk
    tb = min(tb, b_min)
    if b_min // tb < 2 and b_min >= 2 * chunk:
        tb = ((b_min // 2) // chunk) * chunk
    b_pad = pl.cdiv(b_min, tb) * tb
    grid = (b_pad // tb,)
    S = tb // LANES                      # sublane extent of one tile

    # Feature-major, batch folded onto (sublane, lane): (IN, b_pad/128, 128).
    # Pad only when needed; XLA fuses transpose+pad+reshape into one pass.
    x_t = x.astype(jnp.float32).T
    if b_pad != B:
        x_t = jnp.pad(x_t, ((0, 0), (0, b_pad - B)))
    x_t = x_t.reshape(IN, b_pad // LANES, LANES)

    smem_spec = pl.BlockSpec(memory_space=pltpu.MemorySpace.SMEM)
    out = pl.pallas_call(
        _mlp_kernel,
        out_shape=jax.ShapeDtypeStruct((b_pad // LANES, LANES), jnp.float32),
        grid=grid,
        in_specs=[
            smem_spec,                                          # w1 (H, IN)
            smem_spec,                                          # b1 (H,)
            smem_spec,                                          # w2 (H,)
            smem_spec,                                          # b2 (1,)
            pl.BlockSpec((IN, S, LANES), lambda i: (0, i, 0)),  # x tile
        ],
        out_specs=pl.BlockSpec((S, LANES), lambda i: (i, 0)),
        compiler_params=pltpu.CompilerParams(
            dimension_semantics=("parallel",),
            vmem_limit_bytes=32 * 1024 * 1024),
    )(
        w1.astype(jnp.float32),
        b1.astype(jnp.float32),
        w2.reshape(H).astype(jnp.float32),
        b2.reshape(1).astype(jnp.float32),
        x_t,
    )

    # Padded tail lanes hold relu(b1)@w2 + b2 garbage -- sliced off here.
    return out.reshape(b_pad)[:B].reshape(B, 1)


def init_params(key, input_size=3, hidden_size=10):
    """nn.Linear-style init U(-1/sqrt(fan_in), 1/sqrt(fan_in)), PyTorch layout."""
    k1, k2, k3, k4 = jax.random.split(key, 4)
    lim1 = 1.0 / jnp.sqrt(jnp.float32(input_size))
    lim2 = 1.0 / jnp.sqrt(jnp.float32(hidden_size))
    w1 = jax.random.uniform(k1, (hidden_size, input_size), jnp.float32, -lim1, lim1)
    b1 = jax.random.uniform(k2, (hidden_size,), jnp.float32, -lim1, lim1)
    w2 = jax.random.uniform(k3, (1, hidden_size), jnp.float32, -lim2, lim2)
    b2 = jax.random.uniform(k4, (1,), jnp.float32, -lim2, lim2)
    return w1, b1, w2, b2


if __name__ == "__main__":
    key = jax.random.PRNGKey(0)
    k_x, k_p = jax.random.split(key)

    batch, input_size, hidden_size = 8, 3, 10
    x = jax.random.normal(k_x, (batch, input_size), jnp.float32)
    w1, b1, w2, b2 = init_params(k_p, input_size, hidden_size)

    score = sacred_pause_forward(x, w1, b1, w2, b2)
    jax.block_until_ready(score)

    # Pure-JAX reference (identical semantics to the PyTorch forward).
    ref = jnp.maximum(x @ w1.T + b1, 0.0) @ w2.T + b2
    assert score.shape == (batch, 1)
    assert jnp.allclose(score, ref, atol=1e-5, rtol=1e-5)

    print("KERNEL_OK")
</pallas_src>

<mosaic_0001>
module attributes {stable_mosaic.version = 11 : i64} {
  func.func @_mlp_kernel(%arg0: i32, %arg1: memref<10x3xf32, #tpu.memory_space<smem>>, %arg2: memref<10xf32, #tpu.memory_space<smem>>, %arg3: memref<10xf32, #tpu.memory_space<smem>>, %arg4: memref<1xf32, #tpu.memory_space<smem>>, %arg5: memref<3x8x128xf32, #tpu.memory_space<vmem>>, %arg6: memref<8x128xf32, #tpu.memory_space<vmem>>) attributes {dimension_semantics = [#tpu.dimension_semantics<parallel>], iteration_bounds = array<i64: 1>, scalar_prefetch = 0 : i64, scratch_operands = 0 : i64, tpu.core_type = #tpu.core_type<tc>, window_params = [{transform_indices = @transform_0, window_bounds = array<i64: 10, 3>}, {transform_indices = @transform_1, window_bounds = array<i64: 10>}, {transform_indices = @transform_2, window_bounds = array<i64: 10>}, {transform_indices = @transform_3, window_bounds = array<i64: 1>}, {transform_indices = @transform_4, window_bounds = array<i64: 3, 8, 128>}, {transform_indices = @transform_5, window_bounds = array<i64: 8, 128>}]} {
    %c0 = arith.constant 0 : index
    %c0_0 = arith.constant 0 : index
    %c0_1 = arith.constant 0 : index
    %0 = vector.load %arg5[%c0, %c0_0, %c0_1] : memref<3x8x128xf32, #tpu.memory_space<vmem>>, vector<1x8x128xf32>
    %1 = vector.shape_cast %0 : vector<1x8x128xf32> to vector<8x128xf32>
    %c1 = arith.constant 1 : index
    %c0_2 = arith.constant 0 : index
    %c0_3 = arith.constant 0 : index
    %2 = vector.load %arg5[%c1, %c0_2, %c0_3] : memref<3x8x128xf32, #tpu.memory_space<vmem>>, vector<1x8x128xf32>
    %3 = vector.shape_cast %2 : vector<1x8x128xf32> to vector<8x128xf32>
    %c2 = arith.constant 2 : index
    %c0_4 = arith.constant 0 : index
    %c0_5 = arith.constant 0 : index
    %4 = vector.load %arg5[%c2, %c0_4, %c0_5] : memref<3x8x128xf32, #tpu.memory_space<vmem>>, vector<1x8x128xf32>
    %5 = vector.shape_cast %4 : vector<1x8x128xf32> to vector<8x128xf32>
    %c0_6 = arith.constant 0 : index
    %c0_7 = arith.constant 0 : index
    %6 = memref.load %arg1[%c0_6, %c0_7] : memref<10x3xf32, #tpu.memory_space<smem>>
    %7 = vector.broadcast %6 : f32 to vector<8x128xf32>
    %8 = arith.mulf %1, %7 : vector<8x128xf32>
    %c0_8 = arith.constant 0 : index
    %c1_9 = arith.constant 1 : index
    %9 = memref.load %arg1[%c0_8, %c1_9] : memref<10x3xf32, #tpu.memory_space<smem>>
    %10 = vector.broadcast %9 : f32 to vector<8x128xf32>
    %11 = arith.mulf %3, %10 : vector<8x128xf32>
    %12 = arith.addf %8, %11 : vector<8x128xf32>
    %c0_10 = arith.constant 0 : index
    %c2_11 = arith.constant 2 : index
    %13 = memref.load %arg1[%c0_10, %c2_11] : memref<10x3xf32, #tpu.memory_space<smem>>
    %14 = vector.broadcast %13 : f32 to vector<8x128xf32>
    %15 = arith.mulf %5, %14 : vector<8x128xf32>
    %16 = arith.addf %12, %15 : vector<8x128xf32>
    %c0_12 = arith.constant 0 : index
    %17 = memref.load %arg2[%c0_12] : memref<10xf32, #tpu.memory_space<smem>>
    %18 = vector.broadcast %17 : f32 to vector<8x128xf32>
    %19 = arith.addf %16, %18 : vector<8x128xf32>
    %cst = arith.constant 0.000000e+00 : f32
    %20 = vector.broadcast %cst : f32 to vector<8x128xf32>
    %21 = arith.maximumf %19, %20 : vector<8x128xf32>
    %c0_13 = arith.constant 0 : index
    %22 = memref.load %arg3[%c0_13] : memref<10xf32, #tpu.memory_space<smem>>
    %23 = vector.broadcast %22 : f32 to vector<8x128xf32>
    %24 = arith.mulf %21, %23 : vector<8x128xf32>
    %c1_14 = arith.constant 1 : index
    %c0_15 = arith.constant 0 : index
    %25 = memref.load %arg1[%c1_14, %c0_15] : memref<10x3xf32, #tpu.memory_space<smem>>
    %26 = vector.broadcast %25 : f32 to vector<8x128xf32>
    %27 = arith.mulf %1, %26 : vector<8x128xf32>
    %c1_16 = arith.constant 1 : index
    %c1_17 = arith.constant 1 : index
    %28 = memref.load %arg1[%c1_16, %c1_17] : memref<10x3xf32, #tpu.memory_space<smem>>
    %29 = vector.broadcast %28 : f32 to vector<8x128xf32>
    %30 = arith.mulf %3, %29 : vector<8x128xf32>
    %31 = arith.addf %27, %30 : vector<8x128xf32>
    %c1_18 = arith.constant 1 : index
    %c2_19 = arith.constant 2 : index
    %32 = memref.load %arg1[%c1_18, %c2_19] : memref<10x3xf32, #tpu.memory_space<smem>>
    %33 = vector.broadcast %32 : f32 to vector<8x128xf32>
    %34 = arith.mulf %5, %33 : vector<8x128xf32>
    %35 = arith.addf %31, %34 : vector<8x128xf32>
    %c1_20 = arith.constant 1 : index
    %36 = memref.load %arg2[%c1_20] : memref<10xf32, #tpu.memory_space<smem>>
    %37 = vector.broadcast %36 : f32 to vector<8x128xf32>
    %38 = arith.addf %35, %37 : vector<8x128xf32>
    %cst_21 = arith.constant 0.000000e+00 : f32
    %39 = vector.broadcast %cst_21 : f32 to vector<8x128xf32>
    %40 = arith.maximumf %38, %39 : vector<8x128xf32>
    %c1_22 = arith.constant 1 : index
    %41 = memref.load %arg3[%c1_22] : memref<10xf32, #tpu.memory_space<smem>>
    %42 = vector.broadcast %41 : f32 to vector<8x128xf32>
    %43 = arith.mulf %40, %42 : vector<8x128xf32>
    %44 = arith.addf %24, %43 : vector<8x128xf32>
    %c2_23 = arith.constant 2 : index
    %c0_24 = arith.constant 0 : index
    %45 = memref.load %arg1[%c2_23, %c0_24] : memref<10x3xf32, #tpu.memory_space<smem>>
    %46 = vector.broadcast %45 : f32 to vector<8x128xf32>
    %47 = arith.mulf %1, %46 : vector<8x128xf32>
    %c2_25 = arith.constant 2 : index
    %c1_26 = arith.constant 1 : index
    %48 = memref.load %arg1[%c2_25, %c1_26] : memref<10x3xf32, #tpu.memory_space<smem>>
    %49 = vector.broadcast %48 : f32 to vector<8x128xf32>
    %50 = arith.mulf %3, %49 : vector<8x128xf32>
    %51 = arith.addf %47, %50 : vector<8x128xf32>
    %c2_27 = arith.constant 2 : index
    %c2_28 = arith.constant 2 : index
    %52 = memref.load %arg1[%c2_27, %c2_28] : memref<10x3xf32, #tpu.memory_space<smem>>
    %53 = vector.broadcast %52 : f32 to vector<8x128xf32>
    %54 = arith.mulf %5, %53 : vector<8x128xf32>
    %55 = arith.addf %51, %54 : vector<8x128xf32>
    %c2_29 = arith.constant 2 : index
    %56 = memref.load %arg2[%c2_29] : memref<10xf32, #tpu.memory_space<smem>>
    %57 = vector.broadcast %56 : f32 to vector<8x128xf32>
    %58 = arith.addf %55, %57 : vector<8x128xf32>
    %cst_30 = arith.constant 0.000000e+00 : f32
    %59 = vector.broadcast %cst_30 : f32 to vector<8x128xf32>
    %60 = arith.maximumf %58, %59 : vector<8x128xf32>
    %c2_31 = arith.constant 2 : index
    %61 = memref.load %arg3[%c2_31] : memref<10xf32, #tpu.memory_space<smem>>
    %62 = vector.broadcast %61 : f32 to vector<8x128xf32>
    %63 = arith.mulf %60, %62 : vector<8x128xf32>
    %64 = arith.addf %44, %63 : vector<8x128xf32>
    %c3 = arith.constant 3 : index
    %c0_32 = arith.constant 0 : index
    %65 = memref.load %arg1[%c3, %c0_32] : memref<10x3xf32, #tpu.memory_space<smem>>
    %66 = vector.broadcast %65 : f32 to vector<8x128xf32>
    %67 = arith.mulf %1, %66 : vector<8x128xf32>
    %c3_33 = arith.constant 3 : index
    %c1_34 = arith.constant 1 : index
    %68 = memref.load %arg1[%c3_33, %c1_34] : memref<10x3xf32, #tpu.memory_space<smem>>
    %69 = vector.broadcast %68 : f32 to vector<8x128xf32>
    %70 = arith.mulf %3, %69 : vector<8x128xf32>
    %71 = arith.addf %67, %70 : vector<8x128xf32>
    %c3_35 = arith.constant 3 : index
    %c2_36 = arith.constant 2 : index
    %72 = memref.load %arg1[%c3_35, %c2_36] : memref<10x3xf32, #tpu.memory_space<smem>>
    %73 = vector.broadcast %72 : f32 to vector<8x128xf32>
    %74 = arith.mulf %5, %73 : vector<8x128xf32>
    %75 = arith.addf %71, %74 : vector<8x128xf32>
    %c3_37 = arith.constant 3 : index
    %76 = memref.load %arg2[%c3_37] : memref<10xf32, #tpu.memory_space<smem>>
    %77 = vector.broadcast %76 : f32 to vector<8x128xf32>
    %78 = arith.addf %75, %77 : vector<8x128xf32>
    %cst_38 = arith.constant 0.000000e+00 : f32
    %79 = vector.broadcast %cst_38 : f32 to vector<8x128xf32>
    %80 = arith.maximumf %78, %79 : vector<8x128xf32>
    %c3_39 = arith.constant 3 : index
    %81 = memref.load %arg3[%c3_39] : memref<10xf32, #tpu.memory_space<smem>>
    %82 = vector.broadcast %81 : f32 to vector<8x128xf32>
    %83 = arith.mulf %80, %82 : vector<8x128xf32>
    %84 = arith.addf %64, %83 : vector<8x128xf32>
    %c4 = arith.constant 4 : index
    %c0_40 = arith.constant 0 : index
    %85 = memref.load %arg1[%c4, %c0_40] : memref<10x3xf32, #tpu.memory_space<smem>>
    %86 = vector.broadcast %85 : f32 to vector<8x128xf32>
    %87 = arith.mulf %1, %86 : vector<8x128xf32>
    %c4_41 = arith.constant 4 : index
    %c1_42 = arith.constant 1 : index
    %88 = memref.load %arg1[%c4_41, %c1_42] : memref<10x3xf32, #tpu.memory_space<smem>>
    %89 = vector.broadcast %88 : f32 to vector<8x128xf32>
    %90 = arith.mulf %3, %89 : vector<8x128xf32>
    %91 = arith.addf %87, %90 : vector<8x128xf32>
    %c4_43 = arith.constant 4 : index
    %c2_44 = arith.constant 2 : index
    %92 = memref.load %arg1[%c4_43, %c2_44] : memref<10x3xf32, #tpu.memory_space<smem>>
    %93 = vector.broadcast %92 : f32 to vector<8x128xf32>
    %94 = arith.mulf %5, %93 : vector<8x128xf32>
    %95 = arith.addf %91, %94 : vector<8x128xf32>
    %c4_45 = arith.constant 4 : index
    %96 = memref.load %arg2[%c4_45] : memref<10xf32, #tpu.memory_space<smem>>
    %97 = vector.broadcast %96 : f32 to vector<8x128xf32>
    %98 = arith.addf %95, %97 : vector<8x128xf32>
    %cst_46 = arith.constant 0.000000e+00 : f32
    %99 = vector.broadcast %cst_46 : f32 to vector<8x128xf32>
    %100 = arith.maximumf %98, %99 : vector<8x128xf32>
    %c4_47 = arith.constant 4 : index
    %101 = memref.load %arg3[%c4_47] : memref<10xf32, #tpu.memory_space<smem>>
    %102 = vector.broadcast %101 : f32 to vector<8x128xf32>
    %103 = arith.mulf %100, %102 : vector<8x128xf32>
    %104 = arith.addf %84, %103 : vector<8x128xf32>
    %c5 = arith.constant 5 : index
    %c0_48 = arith.constant 0 : index
    %105 = memref.load %arg1[%c5, %c0_48] : memref<10x3xf32, #tpu.memory_space<smem>>
    %106 = vector.broadcast %105 : f32 to vector<8x128xf32>
    %107 = arith.mulf %1, %106 : vector<8x128xf32>
    %c5_49 = arith.constant 5 : index
    %c1_50 = arith.constant 1 : index
    %108 = memref.load %arg1[%c5_49, %c1_50] : memref<10x3xf32, #tpu.memory_space<smem>>
    %109 = vector.broadcast %108 : f32 to vector<8x128xf32>
    %110 = arith.mulf %3, %109 : vector<8x128xf32>
    %111 = arith.addf %107, %110 : vector<8x128xf32>
    %c5_51 = arith.constant 5 : index
    %c2_52 = arith.constant 2 : index
    %112 = memref.load %arg1[%c5_51, %c2_52] : memref<10x3xf32, #tpu.memory_space<smem>>
    %113 = vector.broadcast %112 : f32 to vector<8x128xf32>
    %114 = arith.mulf %5, %113 : vector<8x128xf32>
    %115 = arith.addf %111, %114 : vector<8x128xf32>
    %c5_53 = arith.constant 5 : index
    %116 = memref.load %arg2[%c5_53] : memref<10xf32, #tpu.memory_space<smem>>
    %117 = vector.broadcast %116 : f32 to vector<8x128xf32>
    %118 = arith.addf %115, %117 : vector<8x128xf32>
    %cst_54 = arith.constant 0.000000e+00 : f32
    %119 = vector.broadcast %cst_54 : f32 to vector<8x128xf32>
    %120 = arith.maximumf %118, %119 : vector<8x128xf32>
    %c5_55 = arith.constant 5 : index
    %121 = memref.load %arg3[%c5_55] : memref<10xf32, #tpu.memory_space<smem>>
    %122 = vector.broadcast %121 : f32 to vector<8x128xf32>
    %123 = arith.mulf %120, %122 : vector<8x128xf32>
    %124 = arith.addf %104, %123 : vector<8x128xf32>
    %c6 = arith.constant 6 : index
    %c0_56 = arith.constant 0 : index
    %125 = memref.load %arg1[%c6, %c0_56] : memref<10x3xf32, #tpu.memory_space<smem>>
    %126 = vector.broadcast %125 : f32 to vector<8x128xf32>
    %127 = arith.mulf %1, %126 : vector<8x128xf32>
    %c6_57 = arith.constant 6 : index
    %c1_58 = arith.constant 1 : index
    %128 = memref.load %arg1[%c6_57, %c1_58] : memref<10x3xf32, #tpu.memory_space<smem>>
    %129 = vector.broadcast %128 : f32 to vector<8x128xf32>
    %130 = arith.mulf %3, %129 : vector<8x128xf32>
    %131 = arith.addf %127, %130 : vector<8x128xf32>
    %c6_59 = arith.constant 6 : index
    %c2_60 = arith.constant 2 : index
    %132 = memref.load %arg1[%c6_59, %c2_60] : memref<10x3xf32, #tpu.memory_space<smem>>
    %133 = vector.broadcast %132 : f32 to vector<8x128xf32>
    %134 = arith.mulf %5, %133 : vector<8x128xf32>
    %135 = arith.addf %131, %134 : vector<8x128xf32>
    %c6_61 = arith.constant 6 : index
    %136 = memref.load %arg2[%c6_61] : memref<10xf32, #tpu.memory_space<smem>>
    %137 = vector.broadcast %136 : f32 to vector<8x128xf32>
    %138 = arith.addf %135, %137 : vector<8x128xf32>
    %cst_62 = arith.constant 0.000000e+00 : f32
    %139 = vector.broadcast %cst_62 : f32 to vector<8x128xf32>
    %140 = arith.maximumf %138, %139 : vector<8x128xf32>
    %c6_63 = arith.constant 6 : index
    %141 = memref.load %arg3[%c6_63] : memref<10xf32, #tpu.memory_space<smem>>
    %142 = vector.broadcast %141 : f32 to vector<8x128xf32>
    %143 = arith.mulf %140, %142 : vector<8x128xf32>
    %144 = arith.addf %124, %143 : vector<8x128xf32>
    %c7 = arith.constant 7 : index
    %c0_64 = arith.constant 0 : index
    %145 = memref.load %arg1[%c7, %c0_64] : memref<10x3xf32, #tpu.memory_space<smem>>
    %146 = vector.broadcast %145 : f32 to vector<8x128xf32>
    %147 = arith.mulf %1, %146 : vector<8x128xf32>
    %c7_65 = arith.constant 7 : index
    %c1_66 = arith.constant 1 : index
    %148 = memref.load %arg1[%c7_65, %c1_66] : memref<10x3xf32, #tpu.memory_space<smem>>
    %149 = vector.broadcast %148 : f32 to vector<8x128xf32>
    %150 = arith.mulf %3, %149 : vector<8x128xf32>
    %151 = arith.addf %147, %150 : vector<8x128xf32>
    %c7_67 = arith.constant 7 : index
    %c2_68 = arith.constant 2 : index
    %152 = memref.load %arg1[%c7_67, %c2_68] : memref<10x3xf32, #tpu.memory_space<smem>>
    %153 = vector.broadcast %152 : f32 to vector<8x128xf32>
    %154 = arith.mulf %5, %153 : vector<8x128xf32>
    %155 = arith.addf %151, %154 : vector<8x128xf32>
    %c7_69 = arith.constant 7 : index
    %156 = memref.load %arg2[%c7_69] : memref<10xf32, #tpu.memory_space<smem>>
    %157 = vector.broadcast %156 : f32 to vector<8x128xf32>
    %158 = arith.addf %155, %157 : vector<8x128xf32>
    %cst_70 = arith.constant 0.000000e+00 : f32
    %159 = vector.broadcast %cst_70 : f32 to vector<8x128xf32>
    %160 = arith.maximumf %158, %159 : vector<8x128xf32>
    %c7_71 = arith.constant 7 : index
    %161 = memref.load %arg3[%c7_71] : memref<10xf32, #tpu.memory_space<smem>>
    %162 = vector.broadcast %161 : f32 to vector<8x128xf32>
    %163 = arith.mulf %160, %162 : vector<8x128xf32>
    %164 = arith.addf %144, %163 : vector<8x128xf32>
    %c8 = arith.constant 8 : index
    %c0_72 = arith.constant 0 : index
    %165 = memref.load %arg1[%c8, %c0_72] : memref<10x3xf32, #tpu.memory_space<smem>>
    %166 = vector.broadcast %165 : f32 to vector<8x128xf32>
    %167 = arith.mulf %1, %166 : vector<8x128xf32>
    %c8_73 = arith.constant 8 : index
    %c1_74 = arith.constant 1 : index
    %168 = memref.load %arg1[%c8_73, %c1_74] : memref<10x3xf32, #tpu.memory_space<smem>>
    %169 = vector.broadcast %168 : f32 to vector<8x128xf32>
    %170 = arith.mulf %3, %169 : vector<8x128xf32>
    %171 = arith.addf %167, %170 : vector<8x128xf32>
    %c8_75 = arith.constant 8 : index
    %c2_76 = arith.constant 2 : index
    %172 = memref.load %arg1[%c8_75, %c2_76] : memref<10x3xf32, #tpu.memory_space<smem>>
    %173 = vector.broadcast %172 : f32 to vector<8x128xf32>
    %174 = arith.mulf %5, %173 : vector<8x128xf32>
    %175 = arith.addf %171, %174 : vector<8x128xf32>
    %c8_77 = arith.constant 8 : index
    %176 = memref.load %arg2[%c8_77] : memref<10xf32, #tpu.memory_space<smem>>
    %177 = vector.broadcast %176 : f32 to vector<8x128xf32>
    %178 = arith.addf %175, %177 : vector<8x128xf32>
    %cst_78 = arith.constant 0.000000e+00 : f32
    %179 = vector.broadcast %cst_78 : f32 to vector<8x128xf32>
    %180 = arith.maximumf %178, %179 : vector<8x128xf32>
    %c8_79 = arith.constant 8 : index
    %181 = memref.load %arg3[%c8_79] : memref<10xf32, #tpu.memory_space<smem>>
    %182 = vector.broadcast %181 : f32 to vector<8x128xf32>
    %183 = arith.mulf %180, %182 : vector<8x128xf32>
    %184 = arith.addf %164, %183 : vector<8x128xf32>
    %c9 = arith.constant 9 : index
    %c0_80 = arith.constant 0 : index
    %185 = memref.load %arg1[%c9, %c0_80] : memref<10x3xf32, #tpu.memory_space<smem>>
    %186 = vector.broadcast %185 : f32 to vector<8x128xf32>
    %187 = arith.mulf %1, %186 : vector<8x128xf32>
    %c9_81 = arith.constant 9 : index
    %c1_82 = arith.constant 1 : index
    %188 = memref.load %arg1[%c9_81, %c1_82] : memref<10x3xf32, #tpu.memory_space<smem>>
    %189 = vector.broadcast %188 : f32 to vector<8x128xf32>
    %190 = arith.mulf %3, %189 : vector<8x128xf32>
    %191 = arith.addf %187, %190 : vector<8x128xf32>
    %c9_83 = arith.constant 9 : index
    %c2_84 = arith.constant 2 : index
    %192 = memref.load %arg1[%c9_83, %c2_84] : memref<10x3xf32, #tpu.memory_space<smem>>
    %193 = vector.broadcast %192 : f32 to vector<8x128xf32>
    %194 = arith.mulf %5, %193 : vector<8x128xf32>
    %195 = arith.addf %191, %194 : vector<8x128xf32>
    %c9_85 = arith.constant 9 : index
    %196 = memref.load %arg2[%c9_85] : memref<10xf32, #tpu.memory_space<smem>>
    %197 = vector.broadcast %196 : f32 to vector<8x128xf32>
    %198 = arith.addf %195, %197 : vector<8x128xf32>
    %cst_86 = arith.constant 0.000000e+00 : f32
    %199 = vector.broadcast %cst_86 : f32 to vector<8x128xf32>
    %200 = arith.maximumf %198, %199 : vector<8x128xf32>
    %c9_87 = arith.constant 9 : index
    %201 = memref.load %arg3[%c9_87] : memref<10xf32, #tpu.memory_space<smem>>
    %202 = vector.broadcast %201 : f32 to vector<8x128xf32>
    %203 = arith.mulf %200, %202 : vector<8x128xf32>
    %204 = arith.addf %184, %203 : vector<8x128xf32>
    %c0_88 = arith.constant 0 : index
    %205 = memref.load %arg4[%c0_88] : memref<1xf32, #tpu.memory_space<smem>>
    %206 = vector.broadcast %205 : f32 to vector<8x128xf32>
    %207 = arith.addf %204, %206 : vector<8x128xf32>
    %c0_89 = arith.constant 0 : index
    %c0_90 = arith.constant 0 : index
    %208 = vector.load %arg6[%c0_89, %c0_90] : memref<8x128xf32, #tpu.memory_space<vmem>>, vector<8x128xf32>
    tpu.vector_store %arg6[%c0_89, %c0_90], %207 {strides = array<i32>} : memref<8x128xf32, #tpu.memory_space<vmem>>, vector<8x128xf32>,
    return
  }
  func.func @transform_0(%arg0: i32) -> (i32, i32) {
    %c0_i32 = arith.constant 0 : i32
    %c0_i32_0 = arith.constant 0 : i32
    %c0_i32_1 = arith.constant 0 : i32
    return %c0_i32, %c0_i32_0 : i32, i32
  }
  func.func @transform_1(%arg0: i32) -> i32 {
    %c0_i32 = arith.constant 0 : i32
    %c0_i32_0 = arith.constant 0 : i32
    return %c0_i32 : i32
  }
  func.func @transform_2(%arg0: i32) -> i32 {
    %c0_i32 = arith.constant 0 : i32
    %c0_i32_0 = arith.constant 0 : i32
    return %c0_i32 : i32
  }
  func.func @transform_3(%arg0: i32) -> i32 {
    %c0_i32 = arith.constant 0 : i32
    %c0_i32_0 = arith.constant 0 : i32
    return %c0_i32 : i32
  }
  func.func @transform_4(%arg0: i32) -> (i32, i32, i32) {
    %c0_i32 = arith.constant 0 : i32
    %c0_i32_0 = arith.constant 0 : i32
    %c0_i32_1 = arith.constant 0 : i32
    return %c0_i32, %arg0, %c0_i32_0 : i32, i32, i32
  }
  func.func @transform_5(%arg0: i32) -> (i32, i32) {
    %c0_i32 = arith.constant 0 : i32
    %c0_i32_0 = arith.constant 0 : i32
    return %arg0, %c0_i32 : i32, i32
  }
}

</mosaic_0001>

<llo_original>
// kernel: tpu_custom_call.1
$region0: #{tpu_custom_call.1}
  #allocation0 [shape = 'u32[]', space=smem, size = 0x4, offset = 0x4, fixed_abs, tag = 'smem constant byte address 0x4 - core index']
  #allocation1 [shape = 'u32[144,128]{1,0:T(1,128)}', space=vmem, size = 0x12000, scoped, tag = 'internal scratch']
  #allocation2 [shape = 'f32[1]{0:T(128)S(6)}', space=smem, size = 0x200, scoped, tag = 'scoped memory for tpu_custom_call.1']
  %s0 = inlined_call_operand.vmem [shape: f32[10,3], index: 0, kind: input, shape index: {}]
  %s1 = inlined_call_operand.vmem [shape: f32[10], index: 1, kind: input, shape index: {}]
  %s2 = inlined_call_operand.vmem [shape: f32[10], index: 2, kind: input, shape index: {}]
  %s3 = inlined_call_operand.<no memory space> [shape: f32[1], index: 3, kind: input, shape index: {}]
  %s4 = inlined_call_operand.vmem [shape: f32[3,8,128], index: 4, kind: input, shape index: {}]
  %s5 = inlined_call_operand.hbm [shape: f32[8,128], index: 5, kind: output, shape index: {}]
  %s6 = sld [smem:[#allocation0]]
  $region42: #{tpu_custom_call.1} parent=0
    _
  %s8 = ssub.s32 1, %s6
  %s9 = scalar_select 0, %s8, %s6
  %10 = sst [smem:[#allocation2]] %s3
  $region1: #{tpu_custom_call.1} parent=0
    #allocation3 [shape = 'u8[8192]{0}', space=smem, size = 0x2000, scoped, tag = 'input window, operand 0, single buffered']
    #allocation4 [shape = 's32[1]{0}', space=sflag, size = 0x4, scoped, tag = 'scoped memory for tpu_custom_call.1']
    #allocation5 [shape = 's32[1]{0}', space=sflag, size = 0x4, scoped, tag = 'scoped memory for tpu_custom_call.1']
    #allocation6 [shape = 'u8[512]{0}', space=smem, size = 0x200, scoped, tag = 'input window, operand 1, single buffered']
    #allocation7 [shape = 's32[1]{0}', space=sflag, size = 0x4, scoped, tag = 'scoped memory for tpu_custom_call.1']
    #allocation8 [shape = 'u8[512]{0}', space=smem, size = 0x200, scoped, tag = 'input window, operand 2, single buffered']
    #allocation9 [shape = 'u8[4096]{0}', space=vmem, size = 0x1000, scoped, tag = 'output window, operand 0, single buffered']
    %11 = vsyncpa [#allocation5], 0
    %12 = vsyncpa [#allocation7], 0
    %13 = vsyncpa [#allocation4], 0
    // Predicated region
    $region2: #{tpu_custom_call.1} parent=1 // pred_check
      _
    $region3: #{tpu_custom_call.1} parent=1 // pred_check_branch
      %15 = sbr.rel (0) target = $region5
    $region4: #{tpu_custom_call.1} parent=1 // pred_region
      %s17 = ssub.s32 256, 256
      %18 = vsyncadd [#allocation5], %s17
      %s19 = sshll.u32 %s0, 4
      %s20 = int_to_ptr.vmem [resolvable:$true] %s19
      %25 = dma.vmem_to_smem %s20, 256, [#allocation3], [#allocation5], 128, 128, 8
    $region5: #{tpu_custom_call.1} parent=1 // pred_fallthru
      _
    // Predicated region
    $region6: #{tpu_custom_call.1} parent=1 // pred_check
      _
    $region7: #{tpu_custom_call.1} parent=1 // pred_check_branch
      %27 = sbr.rel (0) target = $region9
    $region8: #{tpu_custom_call.1} parent=1 // pred_region
      %s29 = ssub.s32 16, 16
      %30 = vsyncadd [#allocation7], %s29
      %s32 = sshll.u32 %s1, 4
      %s33 = int_to_ptr.vmem [resolvable:$true] %s32
      %35 = dma.vmem_to_smem %s33, 16, [#allocation6], [#allocation7]
    $region9: #{tpu_custom_call.1} parent=1 // pred_fallthru
      _
    // Predicated region
    $region10: #{tpu_custom_call.1} parent=1 // pred_check
      _
    $region11: #{tpu_custom_call.1} parent=1 // pred_check_branch
      %37 = sbr.rel (0) target = $region13
    $region12: #{tpu_custom_call.1} parent=1 // pred_region
      %s39 = ssub.s32 16, 16
      %40 = vsyncadd [#allocation7], %s39
      %s42 = sshll.u32 %s2, 4
      %s43 = int_to_ptr.vmem [resolvable:$true] %s42
      %45 = dma.vmem_to_smem %s43, 16, [#allocation8], [#allocation7]
    $region13: #{tpu_custom_call.1} parent=1 // pred_fallthru
      _
    // Predicated region
    $region14: #{tpu_custom_call.1} parent=1 // pred_check
      _
    $region15: #{tpu_custom_call.1} parent=1 // pred_check_branch
      %47 = sbr.rel (0) target = $region17
    $region16: #{tpu_custom_call.1} parent=1 // pred_region
      _
    $region17: #{tpu_custom_call.1} parent=1 // pred_fallthru
      _
    // Predicated region
    $region18: #{tpu_custom_call.1} parent=1 // pred_check
      _
    $region19: #{tpu_custom_call.1} parent=1 // pred_check_branch
      %49 = sbr.rel (0) target = $region21
    $region20: #{tpu_custom_call.1} parent=1 // pred_region
      _
    $region21: #{tpu_custom_call.1} parent=1 // pred_fallthru
      _
    // Predicated region
    $region22: #{tpu_custom_call.1} parent=1 // pred_check
      _
    $region23: #{tpu_custom_call.1} parent=1 // pred_check_branch
      %51 = sbr.rel (0) target = $region25
    $region24: #{tpu_custom_call.1} parent=1 // pred_region
      %52 = dma.done [#allocation5], 256
    $region25: #{tpu_custom_call.1} parent=1 // pred_fallthru
      _
    // Predicated region
    $region26: #{tpu_custom_call.1} parent=1 // pred_check
      _
    $region27: #{tpu_custom_call.1} parent=1 // pred_check_branch
      %54 = sbr.rel (0) target = $region29
    $region28: #{tpu_custom_call.1} parent=1 // pred_region
      %55 = dma.done [#allocation7], 16
    $region29: #{tpu_custom_call.1} parent=1 // pred_fallthru
      _
    // Predicated region
    $region30: #{tpu_custom_call.1} parent=1 // pred_check
      _
    $region31: #{tpu_custom_call.1} parent=1 // pred_check_branch
      %57 = sbr.rel (0) target = $region33
    $region32: #{tpu_custom_call.1} parent=1 // pred_region
      %58 = dma.done [#allocation7], 16
    $region33: #{tpu_custom_call.1} parent=1 // pred_fallthru
      _
    %59 = sfence
    %v60 = vld [vmem:[%s4] sm:$0xff]
    %s61 = scalar_lea.vmem %s4, 8
    %v62 = vld [vmem:[%s61] sm:$0xff]
    %s63 = scalar_lea.vmem %s4, 16
    %v64 = vld [vmem:[%s63] sm:$0xff]
    %s65 = sld [smem:[#allocation3]]
    %v66 = vstv %s65
    %v67 = vmul.f32 %v60, %v66
    %s68 = sld [smem:[#allocation3 + $0x1]]
    %v69 = vstv %s68
    %v70 = vmul.f32 %v62, %v69
    %v71 = vadd.f32 %v67, %v70
    %s72 = sld [smem:[#allocation3 + $0x2]]
    %v73 = vstv %s72
    %v74 = vmul.f32 %v64, %v73
    %v75 = vadd.f32 %v71, %v74
    %s76 = sld [smem:[#allocation6]]
    %v77 = vstv %s76
    %v78 = vadd.f32 %v75, %v77
    %v79 = vmax.f32 %v78, 0.0
    %s80 = sld [smem:[#allocation8]]
    %v81 = vstv %s80
    %v82 = vmul.f32 %v79, %v81
    %s83 = sld [smem:[#allocation3 + $0x80]]
    %v84 = vstv %s83
    %v85 = vmul.f32 %v60, %v84
    %s86 = sld [smem:[#allocation3 + $0x81]]
    %v87 = vstv %s86
    %v88 = vmul.f32 %v62, %v87
    %v89 = vadd.f32 %v85, %v88
    %s90 = sld [smem:[#allocation3 + $0x82]]
    %v91 = vstv %s90
    %v92 = vmul.f32 %v64, %v91
    %v93 = vadd.f32 %v89, %v92
    %s94 = sld [smem:[#allocation6 + $0x1]]
    %v95 = vstv %s94
    %v96 = vadd.f32 %v93, %v95
    %v97 = vmax.f32 %v96, 0.0
    %s98 = sld [smem:[#allocation8 + $0x1]]
    %v99 = vstv %s98
    %v100 = vmul.f32 %v97, %v99
    %v101 = vadd.f32 %v82, %v100
    %s102 = sld [smem:[#allocation3 + $0x100]]
    %v103 = vstv %s102
    %v104 = vmul.f32 %v60, %v103
    %s105 = sld [smem:[#allocation3 + $0x101]]
    %v106 = vstv %s105
    %v107 = vmul.f32 %v62, %v106
    %v108 = vadd.f32 %v104, %v107
    %s109 = sld [smem:[#allocation3 + $0x102]]
    %v110 = vstv %s109
    %v111 = vmul.f32 %v64, %v110
    %v112 = vadd.f32 %v108, %v111
    %s113 = sld [smem:[#allocation6 + $0x2]]
    %v114 = vstv %s113
    %v115 = vadd.f32 %v112, %v114
    %v116 = vmax.f32 %v115, 0.0
    %s117 = sld [smem:[#allocation8 + $0x2]]
    %v118 = vstv %s117
    %v119 = vmul.f32 %v116, %v118
    %v120 = vadd.f32 %v101, %v119
    %s121 = sld [smem:[#allocation3 + $0x180]]
    %v122 = vstv %s121
    %v123 = vmul.f32 %v60, %v122
    %s124 = sld [smem:[#allocation3 + $0x181]]
    %v125 = vstv %s124
    %v126 = vmul.f32 %v62, %v125
    %v127 = vadd.f32 %v123, %v126
    %s128 = sld [smem:[#allocation3 + $0x182]]
    %v129 = vstv %s128
    %v130 = vmul.f32 %v64, %v129
    %v131 = vadd.f32 %v127, %v130
    %s132 = sld [smem:[#allocation6 + $0x3]]
    %v133 = vstv %s132
    %v134 = vadd.f32 %v131, %v133
    %v135 = vmax.f32 %v134, 0.0
    %s136 = sld [smem:[#allocation8 + $0x3]]
    %v137 = vstv %s136
    %v138 = vmul.f32 %v135, %v137
    %v139 = vadd.f32 %v120, %v138
    %s140 = sld [smem:[#allocation3 + $0x200]]
    %v141 = vstv %s140
    %v142 = vmul.f32 %v60, %v141
    %s143 = sld [smem:[#allocation3 + $0x201]]
    %v144 = vstv %s143
    %v145 = vmul.f32 %v62, %v144
    %v146 = vadd.f32 %v142, %v145
    %s147 = sld [smem:[#allocation3 + $0x202]]
    %v148 = vstv %s147
    %v149 = vmul.f32 %v64, %v148
    %v150 = vadd.f32 %v146, %v149
    %s151 = sld [smem:[#allocation6 + $0x4]]
    %v152 = vstv %s151
    %v153 = vadd.f32 %v150, %v152
    %v154 = vmax.f32 %v153, 0.0
    %s155 = sld [smem:[#allocation8 + $0x4]]
    %v156 = vstv %s155
    %v157 = vmul.f32 %v154, %v156
    %v158 = vadd.f32 %v139, %v157
    %s159 = sld [smem:[#allocation3 + $0x280]]
    %v160 = vstv %s159
    %v161 = vmul.f32 %v60, %v160
    %s162 = sld [smem:[#allocation3 + $0x281]]
    %v163 = vstv %s162
    %v164 = vmul.f32 %v62, %v163
    %v165 = vadd.f32 %v161, %v164
    %s166 = sld [smem:[#allocation3 + $0x282]]
    %v167 = vstv %s166
    %v168 = vmul.f32 %v64, %v167
    %v169 = vadd.f32 %v165, %v168
    %s170 = sld [smem:[#allocation6 + $0x5]]
    %v171 = vstv %s170
    %v172 = vadd.f32 %v169, %v171
    %v173 = vmax.f32 %v172, 0.0
    %s174 = sld [smem:[#allocation8 + $0x5]]
    %v175 = vstv %s174
    %v176 = vmul.f32 %v173, %v175
    %v177 = vadd.f32 %v158, %v176
    %s178 = sld [smem:[#allocation3 + $0x300]]
    %v179 = vstv %s178
    %v180 = vmul.f32 %v60, %v179
    %s181 = sld [smem:[#allocation3 + $0x301]]
    %v182 = vstv %s181
    %v183 = vmul.f32 %v62, %v182
    %v184 = vadd.f32 %v180, %v183
    %s185 = sld [smem:[#allocation3 + $0x302]]
    %v186 = vstv %s185
    %v187 = vmul.f32 %v64, %v186
    %v188 = vadd.f32 %v184, %v187
    %s189 = sld [smem:[#allocation6 + $0x6]]
    %v190 = vstv %s189
    %v191 = vadd.f32 %v188, %v190
    %v192 = vmax.f32 %v191, 0.0
    %s193 = sld [smem:[#allocation8 + $0x6]]
    %v194 = vstv %s193
    %v195 = vmul.f32 %v192, %v194
    %v196 = vadd.f32 %v177, %v195
    %s197 = sld [smem:[#allocation3 + $0x380]]
    %v198 = vstv %s197
    %v199 = vmul.f32 %v60, %v198
    %s200 = sld [smem:[#allocation3 + $0x381]]
    %v201 = vstv %s200
    %v202 = vmul.f32 %v62, %v201
    %v203 = vadd.f32 %v199, %v202
    %s204 = sld [smem:[#allocation3 + $0x382]]
    %v205 = vstv %s204
    %v206 = vmul.f32 %v64, %v205
    %v207 = vadd.f32 %v203, %v206
    %s208 = sld [smem:[#allocation6 + $0x7]]
    %v209 = vstv %s208
    %v210 = vadd.f32 %v207, %v209
    %v211 = vmax.f32 %v210, 0.0
    %s212 = sld [smem:[#allocation8 + $0x7]]
    %v213 = vstv %s212
    %v214 = vmul.f32 %v211, %v213
    %v215 = vadd.f32 %v196, %v214
    %s216 = sld [smem:[#allocation3 + $0x400]]
    %v217 = vstv %s216
    %v218 = vmul.f32 %v60, %v217
    %s219 = sld [smem:[#allocation3 + $0x401]]
    %v220 = vstv %s219
    %v221 = vmul.f32 %v62, %v220
    %v222 = vadd.f32 %v218, %v221
    %s223 = sld [smem:[#allocation3 + $0x402]]
    %v224 = vstv %s223
    %v225 = vmul.f32 %v64, %v224
    %v226 = vadd.f32 %v222, %v225
    %s227 = sld [smem:[#allocation6 + $0x8]]
    %v228 = vstv %s227
    %v229 = vadd.f32 %v226, %v228
    %v230 = vmax.f32 %v229, 0.0
    %s231 = sld [smem:[#allocation8 + $0x8]]
    %v232 = vstv %s231
    %v233 = vmul.f32 %v230, %v232
    %v234 = vadd.f32 %v215, %v233
    %s235 = sld [smem:[#allocation3 + $0x480]]
    %v236 = vstv %s235
    %v237 = vmul.f32 %v60, %v236
    %s238 = sld [smem:[#allocation3 + $0x481]]
    %v239 = vstv %s238
    %v240 = vmul.f32 %v62, %v239
    %v241 = vadd.f32 %v237, %v240
    %s242 = sld [smem:[#allocation3 + $0x482]]
    %v243 = vstv %s242
    %v244 = vmul.f32 %v64, %v243
    %v245 = vadd.f32 %v241, %v244
    %s246 = sld [smem:[#allocation6 + $0x9]]
    %v247 = vstv %s246
    %v248 = vadd.f32 %v245, %v247
    %v249 = vmax.f32 %v248, 0.0
    %s250 = sld [smem:[#allocation8 + $0x9]]
    %v251 = vstv %s250
    %v252 = vmul.f32 %v249, %v251
    %v253 = vadd.f32 %v234, %v252
    %s254 = sld [smem:[#allocation2]]
    %v255 = vstv %s254
    %v256 = vadd.f32 %v253, %v255
    %257 = vst [vmem:[#allocation9] sm:$0xff] %v256
    // Predicated region
    $region34: #{tpu_custom_call.1} parent=1 // pred_check
      _
    $region35: #{tpu_custom_call.1} parent=1 // pred_check_branch
      %259 = sbr.rel (0) target = $region37
    $region36: #{tpu_custom_call.1} parent=1 // pred_region
      %s261 = ssub.s32 128, 128
      %262 = vsyncadd [#allocation4], %s261
      %s264 = sshll.u32 [#allocation9], 4
      %s265 = int_to_ptr.vmem [resolvable:$true] %s264
      %267 = dma.vmem_to_hbm [thread:$0]  %s265, 128, %s5, [#allocation4]
    $region37: #{tpu_custom_call.1} parent=1 // pred_fallthru
      _
    // Predicated region
    $region38: #{tpu_custom_call.1} parent=1 // pred_check
      _
    $region39: #{tpu_custom_call.1} parent=1 // pred_check_branch
      %269 = sbr.rel (0) target = $region41
    $region40: #{tpu_custom_call.1} parent=1 // pred_region
      %270 = dma.done [#allocation4], 128
    $region41: #{tpu_custom_call.1} parent=1 // pred_fallthru
      _
    %271 = vsyncpa [#allocation4], 1
    %272 = vsyncpa [#allocation5], 1
    %273 = vsyncpa [#allocation7], 1

</llo_original>
